<compile_context>
chip_gen: v6e
topology: v6e:2x2x1
jax: 0.10.0
libtpu: 0.0.40
codegen_flags: <defaults>
</compile_context>

<pallas_src>
import math
import numpy as np
import jax
import jax.numpy as jnp
from jax.experimental import pallas as pl
from jax.experimental.pallas import tpu as pltpu

NUM_TIMESTEPS = 1000   # cfg.num_steps (not provided; typical D3DP value)
SCALE = 1.0            # cfg.scale     (not provided; typical D3DP value)

D_POSE = 128           # ddim feature dim (reference shape = (batch, 256, 128))
D_COND = 64            # 2-D condition feature dim (placeholder net), NOT padded


# ---------------------------------------------------------------------------
# Diffusion schedule buffers (tiny 1-D host-side setup -> plain numpy "glue")
# ---------------------------------------------------------------------------
def cosine_beta_schedule(timesteps, s=0.008):
    steps = timesteps + 1
    x = np.linspace(0, timesteps, steps, dtype=np.float64)
    alphas_cumprod = np.cos((x / timesteps + s) / (1 + s) * math.pi * 0.5) ** 2
    alphas_cumprod = alphas_cumprod / alphas_cumprod[0]
    betas = 1.0 - alphas_cumprod[1:] / alphas_cumprod[:-1]
    return np.clip(betas, 0.0, 0.999)


# ---------------------------------------------------------------------------
# Fused Pallas kernel: q_sample -> clamp -> net -> per-block MSE partial
# ---------------------------------------------------------------------------
def _d3dp_fused_kernel(coef_a_ref, coef_b_ref, tnorm_ref,   # SMEM (B,) f32
                       x0_ref, noise_ref, cond_ref,          # VMEM bf16 tiles
                       w1_ref, w2_ref, bias_ref,             # VMEM net params
                       pred_ref, sse_ref):
    """One grid step = one batch tile (tile_b, T, D)."""
    tb, T, D = x0_ref.shape
    M = tb * T
    base = pl.program_id(0) * tb

    x0 = x0_ref[...].astype(jnp.float32)        # upcast: VPU math stays f32
    noise = noise_ref[...].astype(jnp.float32)
    bias2d = bias_ref[0]                        # (1, D) f32

    # ---- q_sample + clamp, per sample (scalar splats from SMEM) ------------
    # SCALE is folded on the host: coef_b is pre-divided by SCALE and the clip
    # bounds are the constant +-1.1.
    x_rows = []
    for b in range(tb):                         # static unroll; tb is small
        ca = coef_a_ref[base + b]
        cb = coef_b_ref[base + b]
        xb = jnp.clip(ca * x0[b] + cb * noise[b], -1.1, 1.1)   # (T, D) f32
        x_rows.append(xb.astype(jnp.bfloat16))  # bf16 BEFORE assembling (M, D)
    x2d = jnp.concatenate(x_rows, axis=0)       # (M, D) bf16

    # ---- placeholder UNet3DModel: two accumulating MXU dots ----------------
    # TODO(synk): replace placeholder net with the real UNet3DModel.
    h = jnp.dot(x2d, w1_ref[...], preferred_element_type=jnp.float32)
    h = h + jnp.dot(cond_ref[...].reshape(M, -1), w2_ref[...],
                    preferred_element_type=jnp.float32)
    h3 = h.reshape(tb, T, D)

    # ---- time-embedding + tanh epilogue and lane-dense SSE partial ---------
    sse = jnp.zeros((1, D), jnp.float32)
    for b in range(tb):
        tn = tnorm_ref[base + b]
        pred_b = jnp.tanh(h3[b] + tn * bias2d)   # (T, D) f32
        pred_ref[b] = pred_b
        db = pred_b - x0[b]
        sse = sse + jnp.sum(db * db, axis=0, keepdims=True)   # sublane reduce
    sse_ref[...] = sse.reshape(1, 1, D)


def choose_tile_b(B, T, D, Dc, vmem_budget_bytes=12 * 1024 * 1024):
    """Largest divisor of B whose per-block footprint fits the VMEM budget and
    that keeps >=4 grid steps when B allows (>=2 pipelined steps per v7x TC)."""
    def per_block_bytes(tb):
        rows = tb * T
        in_bytes = rows * (4 * D + 2 * Dc)          # bf16 x0 + noise + cond
        out_bytes = rows * D * 4 + D * 4            # f32 pred + sse row
        w_bytes = (D * D + Dc * D) * 2 + D * 4      # bf16 weights + f32 bias
        body = rows * D * 18                        # f32/bf16 temporaries
        return 2 * (in_bytes + out_bytes) + w_bytes + body

    divisors = [d for d in range(1, B + 1) if B % d == 0]
    min_grid = 4 if B >= 4 else 1
    best = 1
    for tb in divisors:
        if B // tb < min_grid:
            continue
        if per_block_bytes(tb) > vmem_budget_bytes:
            continue
        best = max(best, tb)
    return best


def d3dp_fused_forward(coef_a, coef_b, tnorm, x0_bf16, noise_bf16, cond_bf16,
                       w1, w2, bias, *, tile_b,
                       vmem_limit_bytes=32 * 1024 * 1024):
    """pallas_call wrapper for the fused training forward."""
    B, T, D = x0_bf16.shape
    Dc = cond_bf16.shape[-1]
    assert B % tile_b == 0, "tile_b must divide the batch"
    grid_n = B // tile_b
    smem = pl.BlockSpec(memory_space=pltpu.MemorySpace.SMEM)

    pred, sse = pl.pallas_call(
        _d3dp_fused_kernel,
        out_shape=(
            jax.ShapeDtypeStruct((B, T, D), jnp.float32),        # pred_pose
            jax.ShapeDtypeStruct((grid_n, 1, D), jnp.float32),   # per-block SSE
        ),
        grid=(grid_n,),
        in_specs=[
            smem, smem, smem,                                    # coef_a/b, tnorm
            pl.BlockSpec((tile_b, T, D), lambda i: (i, 0, 0)),   # x0 (bf16)
            pl.BlockSpec((tile_b, T, D), lambda i: (i, 0, 0)),   # noise (bf16)
            pl.BlockSpec((tile_b, T, Dc), lambda i: (i, 0, 0)),  # cond (bf16)
            pl.BlockSpec((D, D), lambda i: (0, 0)),              # w1
            pl.BlockSpec((Dc, D), lambda i: (0, 0)),             # w2
            pl.BlockSpec((1, 1, D), lambda i: (0, 0, 0)),        # bias
        ],
        out_specs=(
            pl.BlockSpec((tile_b, T, D), lambda i: (i, 0, 0)),
            pl.BlockSpec((1, 1, D), lambda i: (i, 0, 0)),
        ),
        compiler_params=pltpu.CompilerParams(
            dimension_semantics=("parallel",),   # batch tiles shard across TCs
            vmem_limit_bytes=vmem_limit_bytes),
    )(coef_a, coef_b, tnorm, x0_bf16, noise_bf16, cond_bf16, w1, w2, bias)
    return pred, sse


# ---------------------------------------------------------------------------
# D3DP module (forward pass, is_train=True path)
# ---------------------------------------------------------------------------
class D3DP:
    def __init__(self, sampling_timesteps=1):
        betas = cosine_beta_schedule(NUM_TIMESTEPS)
        alphas = 1.0 - betas
        alphas_cumprod = np.cumprod(alphas, axis=0)
        self.num_timesteps = int(betas.shape[0])
        self.sampling_timesteps = sampling_timesteps
        self.scale = SCALE
        self.sqrt_alphas_cumprod = jnp.asarray(
            np.sqrt(alphas_cumprod), dtype=jnp.float32)
        self.sqrt_one_minus_alphas_cumprod = jnp.asarray(
            np.sqrt(1.0 - alphas_cumprod), dtype=jnp.float32)

        # Deterministic placeholder net params (pose proj + 2d-cond proj + bias).
        kw1, kw2, kb = jax.random.split(jax.random.PRNGKey(42), 3)
        self.w1 = (jax.random.normal(kw1, (D_POSE, D_POSE), jnp.float32)
                   * 0.02).astype(jnp.bfloat16)
        self.w2 = (jax.random.normal(kw2, (D_COND, D_POSE), jnp.float32)
                   * 0.02).astype(jnp.bfloat16)
        self.bias = jax.random.normal(kb, (1, 1, D_POSE), jnp.float32) * 0.02

    # --- prepare_targets RNG (host-side glue, matches per-sample torch RNG) ---
    def _prepare_targets(self, key, shape):
        B = shape[0]
        key_t, key_n = jax.random.split(key)
        t = jax.random.randint(key_t, (B,), 0, self.num_timesteps,
                               dtype=jnp.int32)
        noise = jax.random.normal(key_n, shape, jnp.float32)
        return t, noise

    def forward(self, input_3d, input_2d, joint, key, is_train=True, tile_b=None):
        assert is_train, "only the training forward path is implemented"
        del joint  # TODO(synk): consumed by the real UNet3DModel, unused here.
        B, T, D = input_3d.shape

        t, noise = self._prepare_targets(key, input_3d.shape)
        # extract(): per-sample schedule coefficients, SCALE folded on host.
        coef_a = self.sqrt_alphas_cumprod[t]                                # (B,)
        coef_b = self.sqrt_one_minus_alphas_cumprod[t] * (1.0 / self.scale)  # (B,)
        tnorm = t.astype(jnp.float32) / float(self.num_timesteps)           # (B,)

        # bf16 HBM streams (upcast to f32 inside the kernel).
        x0_bf16 = input_3d.astype(jnp.bfloat16)
        noise_bf16 = noise.astype(jnp.bfloat16)
        cond_bf16 = input_2d.astype(jnp.bfloat16)

        if tile_b is None:
            tile_b = choose_tile_b(B, T, D, input_2d.shape[-1])

        pred_pose, sse = d3dp_fused_forward(
            coef_a, coef_b, tnorm, x0_bf16, noise_bf16, cond_bf16,
            self.w1, self.w2, self.bias, tile_b=tile_b)

        contrast_loss = jnp.float32(0.0)   # placeholder net has no contrast head
        loss = jnp.sum(sse) / jnp.float32(input_3d.size) + contrast_loss
        return loss, pred_pose

    # --- pure-JAX reference of the same forward (for correctness check) ------
    def reference_forward(self, input_3d, input_2d, key):
        B, T, D = input_3d.shape
        t, noise = self._prepare_targets(key, input_3d.shape)
        coef_a = self.sqrt_alphas_cumprod[t].reshape(B, 1, 1)
        coef_b = self.sqrt_one_minus_alphas_cumprod[t].reshape(B, 1, 1)
        tnorm = (t.astype(jnp.float32) / float(self.num_timesteps)).reshape(B, 1, 1)
        # same bf16 HBM quantization as the kernel path
        x0 = input_3d.astype(jnp.bfloat16).astype(jnp.float32)
        nz = noise.astype(jnp.bfloat16).astype(jnp.float32)
        cond = input_2d.astype(jnp.bfloat16)
        x = jnp.clip(coef_a * (x0 * self.scale) + coef_b * nz,
                     -1.1 * self.scale, 1.1 * self.scale) / self.scale
        h = jnp.dot(x.reshape(B * T, D).astype(jnp.bfloat16), self.w1,
                    preferred_element_type=jnp.float32)
        h = h + jnp.dot(cond.reshape(B * T, -1), self.w2,
                        preferred_element_type=jnp.float32)
        pred = jnp.tanh(h.reshape(B, T, D) + tnorm * self.bias)
        loss = jnp.mean((pred - x0) ** 2)
        return loss, pred


# ---------------------------------------------------------------------------
if __name__ == "__main__":
    key = jax.random.PRNGKey(0)
    k3d, k2d, kfwd = jax.random.split(key, 3)

    B, T = 8, 32
    input_3d = jax.random.normal(k3d, (B, T, D_POSE), jnp.float32)   # pose targets
    input_2d = jax.random.normal(k2d, (B, T, D_COND), jnp.float32)   # 2d condition
    joint = jnp.arange(B * 17, dtype=jnp.int32).reshape(B, 17)       # unused here

    model = D3DP(sampling_timesteps=1)
    loss, pred_pose = model.forward(input_3d, input_2d, joint, kfwd, is_train=True)
    jax.block_until_ready((loss, pred_pose))

    # Correctness check against a pure-JAX reference of the same math.
    loss_ref, pred_ref = model.reference_forward(input_3d, input_2d, kfwd)
    np.testing.assert_allclose(np.asarray(pred_pose), np.asarray(pred_ref),
                               atol=2e-3, rtol=2e-3)
    np.testing.assert_allclose(float(loss), float(loss_ref),
                               atol=2e-3, rtol=2e-3)

    assert pred_pose.shape == (B, T, D_POSE)
    assert jnp.isfinite(loss)
    print("KERNEL_OK")
</pallas_src>

<mosaic_0001>
module attributes {stable_mosaic.version = 11 : i64} {
  func.func @_d3dp_fused_kernel(%arg0: i32, %arg1: memref<8xf32, #tpu.memory_space<smem>>, %arg2: memref<8xf32, #tpu.memory_space<smem>>, %arg3: memref<8xf32, #tpu.memory_space<smem>>, %arg4: memref<2x32x128xbf16, #tpu.memory_space<vmem>>, %arg5: memref<2x32x128xbf16, #tpu.memory_space<vmem>>, %arg6: memref<2x32x64xbf16, #tpu.memory_space<vmem>>, %arg7: memref<128x128xbf16, #tpu.memory_space<vmem>>, %arg8: memref<64x128xbf16, #tpu.memory_space<vmem>>, %arg9: memref<1x1x128xf32, #tpu.memory_space<vmem>>, %arg10: memref<2x32x128xf32, #tpu.memory_space<vmem>>, %arg11: memref<1x1x128xf32, #tpu.memory_space<vmem>>) attributes {dimension_semantics = [#tpu.dimension_semantics<parallel>], iteration_bounds = array<i64: 4>, scalar_prefetch = 0 : i64, scratch_operands = 0 : i64, tpu.core_type = #tpu.core_type<tc>, window_params = [{transform_indices = @transform_0, window_bounds = array<i64: 8>}, {transform_indices = @transform_1, window_bounds = array<i64: 8>}, {transform_indices = @transform_2, window_bounds = array<i64: 8>}, {transform_indices = @transform_3, window_bounds = array<i64: 2, 32, 128>}, {transform_indices = @transform_4, window_bounds = array<i64: 2, 32, 128>}, {transform_indices = @transform_5, window_bounds = array<i64: 2, 32, 64>}, {pipeline_mode = #tpu.pipeline_mode<synchronous>, transform_indices = @transform_6, window_bounds = array<i64: 128, 128>}, {pipeline_mode = #tpu.pipeline_mode<synchronous>, transform_indices = @transform_7, window_bounds = array<i64: 64, 128>}, {pipeline_mode = #tpu.pipeline_mode<synchronous>, transform_indices = @transform_8, window_bounds = array<i64: 1, 1, 128>}, {transform_indices = @transform_9, window_bounds = array<i64: 2, 32, 128>}, {transform_indices = @transform_10, window_bounds = array<i64: 1, 1, 128>}]} {
    %c2_i32 = arith.constant 2 : i32
    %0 = arith.muli %arg0, %c2_i32 : i32
    %c0 = arith.constant 0 : index
    %c0_0 = arith.constant 0 : index
    %c0_1 = arith.constant 0 : index
    %1 = vector.load %arg4[%c0, %c0_0, %c0_1] : memref<2x32x128xbf16, #tpu.memory_space<vmem>>, vector<2x32x128xbf16>
    %2 = arith.extf %1 : vector<2x32x128xbf16> to vector<2x32x128xf32>
    %c0_2 = arith.constant 0 : index
    %c0_3 = arith.constant 0 : index
    %c0_4 = arith.constant 0 : index
    %3 = vector.load %arg5[%c0_2, %c0_3, %c0_4] : memref<2x32x128xbf16, #tpu.memory_space<vmem>>, vector<2x32x128xbf16>
    %4 = arith.extf %3 : vector<2x32x128xbf16> to vector<2x32x128xf32>
    %c0_5 = arith.constant 0 : index
    %c0_6 = arith.constant 0 : index
    %c0_7 = arith.constant 0 : index
    %5 = vector.load %arg9[%c0_5, %c0_6, %c0_7] : memref<1x1x128xf32, #tpu.memory_space<vmem>>, vector<1x1x128xf32>
    %6 = vector.shape_cast %5 : vector<1x1x128xf32> to vector<1x128xf32>
    %c0_i32 = arith.constant 0 : i32
    %7 = arith.addi %0, %c0_i32 : i32
    %8 = arith.index_cast %7 : i32 to index
    %9 = memref.load %arg1[%8] : memref<8xf32, #tpu.memory_space<smem>>
    %c0_i32_8 = arith.constant 0 : i32
    %10 = arith.addi %0, %c0_i32_8 : i32
    %11 = arith.index_cast %10 : i32 to index
    %12 = memref.load %arg2[%11] : memref<8xf32, #tpu.memory_space<smem>>
    %13 = vector.extract_strided_slice %2 {offsets = [0, 0, 0], sizes = [1, 32, 128], strides = [1, 1, 1]} : vector<2x32x128xf32> to vector<1x32x128xf32>
    %14 = vector.shape_cast %13 : vector<1x32x128xf32> to vector<32x128xf32>
    %15 = vector.broadcast %9 : f32 to vector<32x128xf32>
    %16 = arith.mulf %15, %14 : vector<32x128xf32>
    %17 = vector.extract_strided_slice %4 {offsets = [0, 0, 0], sizes = [1, 32, 128], strides = [1, 1, 1]} : vector<2x32x128xf32> to vector<1x32x128xf32>
    %18 = vector.shape_cast %17 : vector<1x32x128xf32> to vector<32x128xf32>
    %19 = vector.broadcast %12 : f32 to vector<32x128xf32>
    %20 = arith.mulf %19, %18 : vector<32x128xf32>
    %21 = arith.addf %16, %20 : vector<32x128xf32>
    %cst = arith.constant -1.100000e+00 : f32
    %cst_9 = arith.constant 1.100000e+00 : f32
    %22 = vector.broadcast %cst : f32 to vector<32x128xf32>
    %23 = arith.maximumf %22, %21 : vector<32x128xf32>
    %24 = vector.broadcast %cst_9 : f32 to vector<32x128xf32>
    %25 = arith.minimumf %24, %23 : vector<32x128xf32>
    %26 = arith.truncf %25 : vector<32x128xf32> to vector<32x128xbf16>
    %c1_i32 = arith.constant 1 : i32
    %27 = arith.addi %0, %c1_i32 : i32
    %28 = arith.index_cast %27 : i32 to index
    %29 = memref.load %arg1[%28] : memref<8xf32, #tpu.memory_space<smem>>
    %c1_i32_10 = arith.constant 1 : i32
    %30 = arith.addi %0, %c1_i32_10 : i32
    %31 = arith.index_cast %30 : i32 to index
    %32 = memref.load %arg2[%31] : memref<8xf32, #tpu.memory_space<smem>>
    %33 = vector.extract_strided_slice %2 {offsets = [1, 0, 0], sizes = [1, 32, 128], strides = [1, 1, 1]} : vector<2x32x128xf32> to vector<1x32x128xf32>
    %34 = vector.shape_cast %33 : vector<1x32x128xf32> to vector<32x128xf32>
    %35 = vector.broadcast %29 : f32 to vector<32x128xf32>
    %36 = arith.mulf %35, %34 : vector<32x128xf32>
    %37 = vector.extract_strided_slice %4 {offsets = [1, 0, 0], sizes = [1, 32, 128], strides = [1, 1, 1]} : vector<2x32x128xf32> to vector<1x32x128xf32>
    %38 = vector.shape_cast %37 : vector<1x32x128xf32> to vector<32x128xf32>
    %39 = vector.broadcast %32 : f32 to vector<32x128xf32>
    %40 = arith.mulf %39, %38 : vector<32x128xf32>
    %41 = arith.addf %36, %40 : vector<32x128xf32>
    %cst_11 = arith.constant -1.100000e+00 : f32
    %cst_12 = arith.constant 1.100000e+00 : f32
    %42 = vector.broadcast %cst_11 : f32 to vector<32x128xf32>
    %43 = arith.maximumf %42, %41 : vector<32x128xf32>
    %44 = vector.broadcast %cst_12 : f32 to vector<32x128xf32>
    %45 = arith.minimumf %44, %43 : vector<32x128xf32>
    %46 = arith.truncf %45 : vector<32x128xf32> to vector<32x128xbf16>
    %47 = tpu.concatenate %26, %46 in 0 : vector<32x128xbf16>, vector<32x128xbf16> -> vector<64x128xbf16>
    %c0_13 = arith.constant 0 : index
    %c0_14 = arith.constant 0 : index
    %48 = vector.load %arg7[%c0_13, %c0_14] : memref<128x128xbf16, #tpu.memory_space<vmem>>, vector<128x128xbf16>
    %cst_15 = arith.constant dense<0.000000e+00> : vector<64x128xf32>
    %49 = tpu.matmul %47, %48, %cst_15 {dimension_numbers = #tpu.dot_dimension_numbers<[1], [0], [0], [1], [0, 0, 1, 1], [], []>} : vector<64x128xbf16>, vector<128x128xbf16>, vector<64x128xf32> -> vector<64x128xf32>
    %c0_16 = arith.constant 0 : index
    %c0_17 = arith.constant 0 : index
    %c0_18 = arith.constant 0 : index
    %50 = vector.load %arg6[%c0_16, %c0_17, %c0_18] : memref<2x32x64xbf16, #tpu.memory_space<vmem>>, vector<2x32x64xbf16>
    %51 = vector.shape_cast %50 : vector<2x32x64xbf16> to vector<64x64xbf16>
    %c0_19 = arith.constant 0 : index
    %c0_20 = arith.constant 0 : index
    %52 = vector.load %arg8[%c0_19, %c0_20] : memref<64x128xbf16, #tpu.memory_space<vmem>>, vector<64x128xbf16>
    %cst_21 = arith.constant dense<0.000000e+00> : vector<64x128xf32>
    %53 = tpu.matmul %51, %52, %cst_21 {dimension_numbers = #tpu.dot_dimension_numbers<[1], [0], [0], [1], [0, 0, 1, 1], [], []>} : vector<64x64xbf16>, vector<64x128xbf16>, vector<64x128xf32> -> vector<64x128xf32>
    %54 = arith.addf %49, %53 : vector<64x128xf32>
    %55 = vector.shape_cast %54 : vector<64x128xf32> to vector<2x32x128xf32>
    %cst_22 = arith.constant 0.000000e+00 : f32
    %56 = vector.broadcast %cst_22 : f32 to vector<1x128xf32>
    %c0_i32_23 = arith.constant 0 : i32
    %57 = arith.addi %0, %c0_i32_23 : i32
    %58 = arith.index_cast %57 : i32 to index
    %59 = memref.load %arg3[%58] : memref<8xf32, #tpu.memory_space<smem>>
    %60 = vector.extract_strided_slice %55 {offsets = [0, 0, 0], sizes = [1, 32, 128], strides = [1, 1, 1]} : vector<2x32x128xf32> to vector<1x32x128xf32>
    %61 = vector.shape_cast %60 : vector<1x32x128xf32> to vector<32x128xf32>
    %62 = vector.broadcast %59 : f32 to vector<1x128xf32>
    %63 = arith.mulf %62, %6 : vector<1x128xf32>
    %64 = vector.broadcast %63 : vector<1x128xf32> to vector<32x128xf32>
    %65 = arith.addf %61, %64 : vector<32x128xf32>
    %66 = math.tanh %65 : vector<32x128xf32>
    %c0_24 = arith.constant 0 : index
    %c0_25 = arith.constant 0 : index
    %c0_26 = arith.constant 0 : index
    %67 = vector.load %arg10[%c0_24, %c0_25, %c0_26] : memref<2x32x128xf32, #tpu.memory_space<vmem>>, vector<1x32x128xf32>
    %68 = vector.shape_cast %67 : vector<1x32x128xf32> to vector<32x128xf32>
    %69 = vector.shape_cast %66 : vector<32x128xf32> to vector<1x32x128xf32>
    tpu.vector_store %arg10[%c0_24, %c0_25, %c0_26], %69 {strides = array<i32>} : memref<2x32x128xf32, #tpu.memory_space<vmem>>, vector<1x32x128xf32>,
    %70 = vector.extract_strided_slice %2 {offsets = [0, 0, 0], sizes = [1, 32, 128], strides = [1, 1, 1]} : vector<2x32x128xf32> to vector<1x32x128xf32>
    %71 = vector.shape_cast %70 : vector<1x32x128xf32> to vector<32x128xf32>
    %72 = arith.subf %66, %71 : vector<32x128xf32>
    %73 = arith.mulf %72, %72 : vector<32x128xf32>
    %cst_27 = arith.constant dense<0.000000e+00> : vector<128xf32>
    %74 = vector.multi_reduction <add>, %73, %cst_27 [0] : vector<32x128xf32> to vector<128xf32>
    %75 = vector.shape_cast %74 : vector<128xf32> to vector<1x128xf32>
    %76 = arith.addf %56, %75 : vector<1x128xf32>
    %c1_i32_28 = arith.constant 1 : i32
    %77 = arith.addi %0, %c1_i32_28 : i32
    %78 = arith.index_cast %77 : i32 to index
    %79 = memref.load %arg3[%78] : memref<8xf32, #tpu.memory_space<smem>>
    %80 = vector.extract_strided_slice %55 {offsets = [1, 0, 0], sizes = [1, 32, 128], strides = [1, 1, 1]} : vector<2x32x128xf32> to vector<1x32x128xf32>
    %81 = vector.shape_cast %80 : vector<1x32x128xf32> to vector<32x128xf32>
    %82 = vector.broadcast %79 : f32 to vector<1x128xf32>
    %83 = arith.mulf %82, %6 : vector<1x128xf32>
    %84 = vector.broadcast %83 : vector<1x128xf32> to vector<32x128xf32>
    %85 = arith.addf %81, %84 : vector<32x128xf32>
    %86 = math.tanh %85 : vector<32x128xf32>
    %c1 = arith.constant 1 : index
    %c0_29 = arith.constant 0 : index
    %c0_30 = arith.constant 0 : index
    %87 = vector.load %arg10[%c1, %c0_29, %c0_30] : memref<2x32x128xf32, #tpu.memory_space<vmem>>, vector<1x32x128xf32>
    %88 = vector.shape_cast %87 : vector<1x32x128xf32> to vector<32x128xf32>
    %89 = vector.shape_cast %86 : vector<32x128xf32> to vector<1x32x128xf32>
    tpu.vector_store %arg10[%c1, %c0_29, %c0_30], %89 {strides = array<i32>} : memref<2x32x128xf32, #tpu.memory_space<vmem>>, vector<1x32x128xf32>,
    %90 = vector.extract_strided_slice %2 {offsets = [1, 0, 0], sizes = [1, 32, 128], strides = [1, 1, 1]} : vector<2x32x128xf32> to vector<1x32x128xf32>
    %91 = vector.shape_cast %90 : vector<1x32x128xf32> to vector<32x128xf32>
    %92 = arith.subf %86, %91 : vector<32x128xf32>
    %93 = arith.mulf %92, %92 : vector<32x128xf32>
    %cst_31 = arith.constant dense<0.000000e+00> : vector<128xf32>
    %94 = vector.multi_reduction <add>, %93, %cst_31 [0] : vector<32x128xf32> to vector<128xf32>
    %95 = vector.shape_cast %94 : vector<128xf32> to vector<1x128xf32>
    %96 = arith.addf %76, %95 : vector<1x128xf32>
    %97 = vector.shape_cast %96 : vector<1x128xf32> to vector<1x1x128xf32>
    %c0_32 = arith.constant 0 : index
    %c0_33 = arith.constant 0 : index
    %c0_34 = arith.constant 0 : index
    %98 = vector.load %arg11[%c0_32, %c0_33, %c0_34] : memref<1x1x128xf32, #tpu.memory_space<vmem>>, vector<1x1x128xf32>
    tpu.vector_store %arg11[%c0_32, %c0_33, %c0_34], %97 {strides = array<i32>} : memref<1x1x128xf32, #tpu.memory_space<vmem>>, vector<1x1x128xf32>,
    return
  }
  func.func @transform_0(%arg0: i32) -> i32 {
    %c0_i32 = arith.constant 0 : i32
    %c0_i32_0 = arith.constant 0 : i32
    return %c0_i32 : i32
  }
  func.func @transform_1(%arg0: i32) -> i32 {
    %c0_i32 = arith.constant 0 : i32
    %c0_i32_0 = arith.constant 0 : i32
    return %c0_i32 : i32
  }
  func.func @transform_2(%arg0: i32) -> i32 {
    %c0_i32 = arith.constant 0 : i32
    %c0_i32_0 = arith.constant 0 : i32
    return %c0_i32 : i32
  }
  func.func @transform_3(%arg0: i32) -> (i32, i32, i32) {
    %c0_i32 = arith.constant 0 : i32
    %c0_i32_0 = arith.constant 0 : i32
    %c0_i32_1 = arith.constant 0 : i32
    return %arg0, %c0_i32, %c0_i32_0 : i32, i32, i32
  }
  func.func @transform_4(%arg0: i32) -> (i32, i32, i32) {
    %c0_i32 = arith.constant 0 : i32
    %c0_i32_0 = arith.constant 0 : i32
    %c0_i32_1 = arith.constant 0 : i32
    return %arg0, %c0_i32, %c0_i32_0 : i32, i32, i32
  }
  func.func @transform_5(%arg0: i32) -> (i32, i32, i32) {
    %c0_i32 = arith.constant 0 : i32
    %c0_i32_0 = arith.constant 0 : i32
    %c0_i32_1 = arith.constant 0 : i32
    return %arg0, %c0_i32, %c0_i32_0 : i32, i32, i32
  }
  func.func @transform_6(%arg0: i32) -> (i32, i32) {
    %c0_i32 = arith.constant 0 : i32
    %c0_i32_0 = arith.constant 0 : i32
    %c0_i32_1 = arith.constant 0 : i32
    return %c0_i32, %c0_i32_0 : i32, i32
  }
  func.func @transform_7(%arg0: i32) -> (i32, i32) {
    %c0_i32 = arith.constant 0 : i32
    %c0_i32_0 = arith.constant 0 : i32
    %c0_i32_1 = arith.constant 0 : i32
    return %c0_i32, %c0_i32_0 : i32, i32
  }
  func.func @transform_8(%arg0: i32) -> (i32, i32, i32) {
    %c0_i32 = arith.constant 0 : i32
    %c0_i32_0 = arith.constant 0 : i32
    %c0_i32_1 = arith.constant 0 : i32
    %c0_i32_2 = arith.constant 0 : i32
    return %c0_i32, %c0_i32_0, %c0_i32_1 : i32, i32, i32
  }
  func.func @transform_9(%arg0: i32) -> (i32, i32, i32) {
    %c0_i32 = arith.constant 0 : i32
    %c0_i32_0 = arith.constant 0 : i32
    %c0_i32_1 = arith.constant 0 : i32
    return %arg0, %c0_i32, %c0_i32_0 : i32, i32, i32
  }
  func.func @transform_10(%arg0: i32) -> (i32, i32, i32) {
    %c0_i32 = arith.constant 0 : i32
    %c0_i32_0 = arith.constant 0 : i32
    %c0_i32_1 = arith.constant 0 : i32
    return %arg0, %c0_i32, %c0_i32_0 : i32, i32, i32
  }
}

</mosaic_0001>

<llo_original>
// kernel: tpu_custom_call.1
$region0: #{tpu_custom_call.1}
  #allocation0 [shape = 'u32[]', space=smem, size = 0x4, offset = 0x4, fixed_abs, tag = 'smem constant byte address 0x4 - core index']
  #allocation1 [shape = 'u32[144,128]{1,0:T(1,128)}', space=vmem, size = 0x12000, scoped, tag = 'internal scratch']
  %s0 = inlined_call_operand.hbm [shape: f32[8], index: 0, kind: input, shape index: {}]
  %s1 = inlined_call_operand.vmem [shape: f32[8], index: 1, kind: input, shape index: {}]
  %s2 = inlined_call_operand.vmem [shape: f32[8], index: 2, kind: input, shape index: {}]
  %s3 = inlined_call_operand.hbm [shape: bf16[8,32,128], index: 3, kind: input, shape index: {}]
  %s4 = inlined_call_operand.hbm [shape: bf16[8,32,128], index: 4, kind: input, shape index: {}]
  %s5 = inlined_call_operand.hbm [shape: bf16[8,32,64], index: 5, kind: input, shape index: {}]
  %s6 = inlined_call_operand.hbm [shape: bf16[128,128], index: 6, kind: input, shape index: {}]
  %s7 = inlined_call_operand.hbm [shape: bf16[64,128], index: 7, kind: input, shape index: {}]
  %s8 = inlined_call_operand.vmem [shape: f32[1,1,128], index: 8, kind: input, shape index: {}]
  %s9 = inlined_call_operand.hbm [shape: f32[8,32,128], index: 9, kind: output, shape index: {0}]
  %s10 = inlined_call_operand.hbm [shape: f32[4,1,128], index: 10, kind: output, shape index: {1}]
  %11 = xla_tuple %s9, %s10
  %s12 = sld [smem:[#allocation0]]
  $region109: #{tpu_custom_call.1} parent=0
    _
  %s14 = ssub.s32 1, %s12
  %s15 = scalar_select 0, %s14, %s12
  $region1: #{tpu_custom_call.1} parent=0
    #allocation2 [shape = 'u8[512]{0}', space=smem, size = 0x200, scoped, tag = 'input window, operand 0, single buffered']
    #allocation3 [shape = 's32[2]{0}', space=sflag, size = 0x8, scoped, tag = 'scoped memory for tpu_custom_call.1']
    #allocation4 [shape = 's32[2]{0}', space=sflag, size = 0x8, scoped, tag = 'scoped memory for tpu_custom_call.1']
    #allocation5 [shape = 's32[2]{0}', space=sflag, size = 0x8, scoped, tag = 'scoped memory for tpu_custom_call.1']
    #allocation6 [shape = 's32[2]{0}', space=sflag, size = 0x8, scoped, tag = 'scoped memory for tpu_custom_call.1']
    #allocation7 [shape = 'u8[512]{0}', space=smem, size = 0x200, scoped, tag = 'input window, operand 1, single buffered']
    #allocation8 [shape = 'u8[512]{0}', space=smem, size = 0x200, scoped, tag = 'input window, operand 2, single buffered']
    #allocation9 [shape = 's32[1]{0}', space=sflag, size = 0x4, scoped, tag = 'scoped memory for tpu_custom_call.1']
    #allocation10 [shape = 'u8[32768]{0}', space=vmem, size = 0x8000, scoped, tag = 'input window, operand 3']
    #allocation11 [shape = 'u8[32768]{0}', space=vmem, size = 0x8000, scoped, tag = 'input window, operand 4']
    #allocation12 [shape = 's32[2]{0}', space=sflag, size = 0x8, scoped, tag = 'scoped memory for tpu_custom_call.1']
    #allocation13 [shape = 'u8[32768]{0}', space=vmem, size = 0x8000, scoped, tag = 'input window, operand 5']
    #allocation14 [shape = 'u8[32768]{0}', space=vmem, size = 0x8000, scoped, tag = 'input window, operand 6, single buffered']
    #allocation15 [shape = 's32[1]{0}', space=sflag, size = 0x4, scoped, tag = 'scoped memory for tpu_custom_call.1']
    #allocation16 [shape = 'u8[16384]{0}', space=vmem, size = 0x4000, scoped, tag = 'input window, operand 7, single buffered']
    #allocation17 [shape = 'u8[65536]{0}', space=vmem, size = 0x10000, scoped, tag = 'output window, operand 0']
    #allocation18 [shape = 'u8[1024]{0}', space=vmem, size = 0x400, scoped, tag = 'output window, operand 1']
    #allocation19 [shape = 's32[2]{0}', space=sflag, size = 0x8, scoped, tag = 'scoped memory for tpu_custom_call.1']
    %16 = vsyncpa [#allocation5], 0
    %17 = vsyncpa [#allocation6], 0
    %18 = vsyncpa [#allocation9], 0
    %19 = vsyncpa [#allocation3], 0
    %s20 = scalar_lea.sflag [#allocation3], 1
    %21 = vsyncpa %s20, 0
    %22 = vsyncpa [#allocation12], 0
    %s23 = scalar_lea.sflag [#allocation12], 1
    %24 = vsyncpa %s23, 0
    %25 = vsyncpa [#allocation15], 0
    %26 = vsyncpa [#allocation4], 0
    %s27 = scalar_lea.sflag [#allocation4], 1
    %28 = vsyncpa %s27, 0
    %29 = vsyncpa [#allocation19], 0
    %s30 = scalar_lea.sflag [#allocation19], 1
    %31 = vsyncpa %s30, 0
    loop: start=0, step=1, limit=6
    $region2: #{tpu_custom_call.1} parent=1 // loop_pre_header
      _
    $region3: #{tpu_custom_call.1} parent=1 // loop_header
      %s33 = sphi 0, %s37
      %p34 = scmp.ge.s32.totalorder %s33, 6
      %s41 = sphi 0, %s41
      %s43 = sphi 0, %s41
      %s44 = sphi 0, %s43
      %s58 = sphi 0, %s44
      %s62 = sphi 0, %s62
      %s64 = sphi 0, %s62
      %s65 = sphi 0, %s64
      %s79 = sphi 0, %s65
      %s83 = sphi 0, %s83
      %s85 = sphi 0, %s83
      %s86 = sphi 0, %s85
      %s100 = sphi 0, %s86
      %s106 = sphi 0, %s108
      %s109 = sphi 0, %s106
      %s110 = sphi 0, %s109
      %s126 = sphi 0, %s110
      %s132 = sphi 0, %s134
      %s135 = sphi 0, %s132
      %s136 = sphi 0, %s135
      %s152 = sphi 0, %s136
      %s158 = sphi 0, %s160
      %s161 = sphi 0, %s158
      %s162 = sphi 0, %s161
      %s178 = sphi 0, %s162
      %s182 = sphi 0, %s182
      %s184 = sphi 0, %s182
      %s185 = sphi 0, %s184
      %s199 = sphi 0, %s185
      %s203 = sphi 0, %s203
      %s205 = sphi 0, %s203
      %s206 = sphi 0, %s205
      %s220 = sphi 0, %s206
      %s224 = sphi 0, %s224
      %s226 = sphi 0, %s224
      %s227 = sphi 0, %s226
      %s241 = sphi 0, %s227
      %s247 = sphi 0, %s249
      %s250 = sphi 0, %s247
      %s251 = sphi 0, %s250
      %s267 = sphi 0, %s251
      %s273 = sphi 0, %s275
      %s276 = sphi 0, %s273
      %s277 = sphi 0, %s276
      %s293 = sphi 0, %s277
    $region4: #{tpu_custom_call.1} parent=1 // loop_header_branch
      %36 = sbr.rel (%p34) target = $region8
    $region5: #{tpu_custom_call.1} parent=1 // loop_body
      %s38 = ssub.s32 %s33, 1
      %s39 = ssub.s32 %s33, 2
      %s40 = sadd.s32 %s33, 1
      %s42 = sadd.s32 %s41, 1
      %p45 = scmp.eq.s32.totalorder %s33, 3
      %p46 = scmp.ne.s32.totalorder %s41, %s43
      %p47 = scmp.eq.s32.totalorder %s33, 0
      %p48 = por %p46, %p47
      %p49 = scmp.ne.s32.totalorder %s41, %s43
      %p50 = scmp.eq.s32.totalorder %s38, 3
      %p51 = por %p49, %p50
      %p52 = scmp.ne.s32.totalorder %s43, %s44
      %p53 = scmp.eq.s32.totalorder %s38, 0
      %p54 = por %p52, %p53
      %p55 = scmp.ne.s32.totalorder %s43, %s44
      %p56 = scmp.eq.s32.totalorder %s39, 3
      %p57 = por %p55, %p56
      %p59 = scmp.ne.s32.totalorder %s44, %s58
      %p60 = scmp.eq.s32.totalorder %s39, 0
      %p61 = por %p59, %p60
      %s63 = sadd.s32 %s62, 1
      %p66 = scmp.eq.s32.totalorder %s33, 3
      %p67 = scmp.ne.s32.totalorder %s62, %s64
      %p68 = scmp.eq.s32.totalorder %s33, 0
      %p69 = por %p67, %p68
      %p70 = scmp.ne.s32.totalorder %s62, %s64
      %p71 = scmp.eq.s32.totalorder %s38, 3
      %p72 = por %p70, %p71
      %p73 = scmp.ne.s32.totalorder %s64, %s65
      %p74 = scmp.eq.s32.totalorder %s38, 0
      %p75 = por %p73, %p74
      %p76 = scmp.ne.s32.totalorder %s64, %s65
      %p77 = scmp.eq.s32.totalorder %s39, 3
      %p78 = por %p76, %p77
      %p80 = scmp.ne.s32.totalorder %s65, %s79
      %p81 = scmp.eq.s32.totalorder %s39, 0
      %p82 = por %p80, %p81
      %s84 = sadd.s32 %s83, 1
      %p87 = scmp.eq.s32.totalorder %s33, 3
      %p88 = scmp.ne.s32.totalorder %s83, %s85
      %p89 = scmp.eq.s32.totalorder %s33, 0
      %p90 = por %p88, %p89
      %p91 = scmp.ne.s32.totalorder %s83, %s85
      %p92 = scmp.eq.s32.totalorder %s38, 3
      %p93 = por %p91, %p92
      %p94 = scmp.ne.s32.totalorder %s85, %s86
      %p95 = scmp.eq.s32.totalorder %s38, 0
      %p96 = por %p94, %p95
      %p97 = scmp.ne.s32.totalorder %s85, %s86
      %p98 = scmp.eq.s32.totalorder %s39, 3
      %p99 = por %p97, %p98
      %p101 = scmp.ne.s32.totalorder %s86, %s100
      %p102 = scmp.eq.s32.totalorder %s39, 0
      %p103 = por %p101, %p102
      %s104 = ssub.s32 %s33, %s40
      %p105 = scmp.eq.s32.totalorder %s104, 0
      %s107 = sadd.s32 %s106, 1
      %s108 = scalar_select %p105, %s106, %s107
      %p111 = pneg %p105
      %p112 = scmp.eq.s32.totalorder %s33, 3
      %p113 = por %p111, %p112
      %p114 = scmp.ne.s32.totalorder %s106, %s109
      %p115 = scmp.eq.s32.totalorder %s33, 0
      %p116 = por %p114, %p115
      %p117 = scmp.ne.s32.totalorder %s106, %s109
      %p118 = scmp.eq.s32.totalorder %s38, 3
      %p119 = por %p117, %p118
      %p120 = scmp.ne.s32.totalorder %s109, %s110
      %p121 = scmp.eq.s32.totalorder %s38, 0
      %p122 = por %p120, %p121
      %p123 = scmp.ne.s32.totalorder %s109, %s110
      %p124 = scmp.eq.s32.totalorder %s39, 3
      %p125 = por %p123, %p124
      %p127 = scmp.ne.s32.totalorder %s110, %s126
      %p128 = scmp.eq.s32.totalorder %s39, 0
      %p129 = por %p127, %p128
      %s130 = ssub.s32 %s33, %s40
      %p131 = scmp.eq.s32.totalorder %s130, 0
      %s133 = sadd.s32 %s132, 1
      %s134 = scalar_select %p131, %s132, %s133
      %p137 = pneg %p131
      %p138 = scmp.eq.s32.totalorder %s33, 3
      %p139 = por %p137, %p138
      %p140 = scmp.ne.s32.totalorder %s132, %s135
      %p141 = scmp.eq.s32.totalorder %s33, 0
      %p142 = por %p140, %p141
      %p143 = scmp.ne.s32.totalorder %s132, %s135
      %p144 = scmp.eq.s32.totalorder %s38, 3
      %p145 = por %p143, %p144
      %p146 = scmp.ne.s32.totalorder %s135, %s136
      %p147 = scmp.eq.s32.totalorder %s38, 0
      %p148 = por %p146, %p147
      %p149 = scmp.ne.s32.totalorder %s135, %s136
      %p150 = scmp.eq.s32.totalorder %s39, 3
      %p151 = por %p149, %p150
      %p153 = scmp.ne.s32.totalorder %s136, %s152
      %p154 = scmp.eq.s32.totalorder %s39, 0
      %p155 = por %p153, %p154
      %s156 = ssub.s32 %s33, %s40
      %p157 = scmp.eq.s32.totalorder %s156, 0
      %s159 = sadd.s32 %s158, 1
      %s160 = scalar_select %p157, %s158, %s159
      %p163 = pneg %p157
      %p164 = scmp.eq.s32.totalorder %s33, 3
      %p165 = por %p163, %p164
      %p166 = scmp.ne.s32.totalorder %s158, %s161
      %p167 = scmp.eq.s32.totalorder %s33, 0
      %p168 = por %p166, %p167
      %p169 = scmp.ne.s32.totalorder %s158, %s161
      %p170 = scmp.eq.s32.totalorder %s38, 3
      %p171 = por %p169, %p170
      %p172 = scmp.ne.s32.totalorder %s161, %s162
      %p173 = scmp.eq.s32.totalorder %s38, 0
      %p174 = por %p172, %p173
      %p175 = scmp.ne.s32.totalorder %s161, %s162
      %p176 = scmp.eq.s32.totalorder %s39, 3
      %p177 = por %p175, %p176
      %p179 = scmp.ne.s32.totalorder %s162, %s178
      %p180 = scmp.eq.s32.totalorder %s39, 0
      %p181 = por %p179, %p180
      %s183 = sadd.s32 %s182, 1
      %p186 = scmp.eq.s32.totalorder %s33, 3
      %p187 = scmp.ne.s32.totalorder %s182, %s184
      %p188 = scmp.eq.s32.totalorder %s33, 0
      %p189 = por %p187, %p188
      %p190 = scmp.ne.s32.totalorder %s182, %s184
      %p191 = scmp.eq.s32.totalorder %s38, 3
      %p192 = por %p190, %p191
      %p193 = scmp.ne.s32.totalorder %s184, %s185
      %p194 = scmp.eq.s32.totalorder %s38, 0
      %p195 = por %p193, %p194
      %p196 = scmp.ne.s32.totalorder %s184, %s185
      %p197 = scmp.eq.s32.totalorder %s39, 3
      %p198 = por %p196, %p197
      %p200 = scmp.ne.s32.totalorder %s185, %s199
      %p201 = scmp.eq.s32.totalorder %s39, 0
      %p202 = por %p200, %p201
      %s204 = sadd.s32 %s203, 1
      %p207 = scmp.eq.s32.totalorder %s33, 3
      %p208 = scmp.ne.s32.totalorder %s203, %s205
      %p209 = scmp.eq.s32.totalorder %s33, 0
      %p210 = por %p208, %p209
      %p211 = scmp.ne.s32.totalorder %s203, %s205
      %p212 = scmp.eq.s32.totalorder %s38, 3
      %p213 = por %p211, %p212
      %p214 = scmp.ne.s32.totalorder %s205, %s206
      %p215 = scmp.eq.s32.totalorder %s38, 0
      %p216 = por %p214, %p215
      %p217 = scmp.ne.s32.totalorder %s205, %s206
      %p218 = scmp.eq.s32.totalorder %s39, 3
      %p219 = por %p217, %p218
      %p221 = scmp.ne.s32.totalorder %s206, %s220
      %p222 = scmp.eq.s32.totalorder %s39, 0
      %p223 = por %p221, %p222
      %s225 = sadd.s32 %s224, 1
      %p228 = scmp.eq.s32.totalorder %s33, 3
      %p229 = scmp.ne.s32.totalorder %s224, %s226
      %p230 = scmp.eq.s32.totalorder %s33, 0
      %p231 = por %p229, %p230
      %p232 = scmp.ne.s32.totalorder %s224, %s226
      %p233 = scmp.eq.s32.totalorder %s38, 3
      %p234 = por %p232, %p233
      %p235 = scmp.ne.s32.totalorder %s226, %s227
      %p236 = scmp.eq.s32.totalorder %s38, 0
      %p237 = por %p235, %p236
      %p238 = scmp.ne.s32.totalorder %s226, %s227
      %p239 = scmp.eq.s32.totalorder %s39, 3
      %p240 = por %p238, %p239
      %p242 = scmp.ne.s32.totalorder %s227, %s241
      %p243 = scmp.eq.s32.totalorder %s39, 0
      %p244 = por %p242, %p243
      %s245 = ssub.s32 %s33, %s40
      %p246 = scmp.eq.s32.totalorder %s245, 0
      %s248 = sadd.s32 %s247, 1
      %s249 = scalar_select %p246, %s247, %s248
      %p252 = pneg %p246
      %p253 = scmp.eq.s32.totalorder %s33, 3
      %p254 = por %p252, %p253
      %p255 = scmp.ne.s32.totalorder %s247, %s250
      %p256 = scmp.eq.s32.totalorder %s33, 0
      %p257 = por %p255, %p256
      %p258 = scmp.ne.s32.totalorder %s247, %s250
      %p259 = scmp.eq.s32.totalorder %s38, 3
      %p260 = por %p258, %p259
      %p261 = scmp.ne.s32.totalorder %s250, %s251
      %p262 = scmp.eq.s32.totalorder %s38, 0
      %p263 = por %p261, %p262
      %p264 = scmp.ne.s32.totalorder %s250, %s251
      %p265 = scmp.eq.s32.totalorder %s39, 3
      %p266 = por %p264, %p265
      %p268 = scmp.ne.s32.totalorder %s251, %s267
      %p269 = scmp.eq.s32.totalorder %s39, 0
      %p270 = por %p268, %p269
      %s271 = ssub.s32 %s33, %s40
      %p272 = scmp.eq.s32.totalorder %s271, 0
      %s274 = sadd.s32 %s273, 1
      %s275 = scalar_select %p272, %s273, %s274
      %p278 = pneg %p272
      %p279 = scmp.eq.s32.totalorder %s33, 3
      %p280 = por %p278, %p279
      %p281 = scmp.ne.s32.totalorder %s273, %s276
      %p282 = scmp.eq.s32.totalorder %s33, 0
      %p283 = por %p281, %p282
      %p284 = scmp.ne.s32.totalorder %s273, %s276
      %p285 = scmp.eq.s32.totalorder %s38, 3
      %p286 = por %p284, %p285
      %p287 = scmp.ne.s32.totalorder %s276, %s277
      %p288 = scmp.eq.s32.totalorder %s38, 0
      %p289 = por %p287, %p288
      %p290 = scmp.ne.s32.totalorder %s276, %s277
      %p291 = scmp.eq.s32.totalorder %s39, 3
      %p292 = por %p290, %p291
      %p294 = scmp.ne.s32.totalorder %s277, %s293
      %p295 = scmp.eq.s32.totalorder %s39, 0
      %p296 = por %p294, %p295
      %p297 = scmp.le.s32.totalorder 1, %s33
      %p298 = scmp.lt.s32.totalorder %s33, 5
      %p299 = pnand %p297, %p298
      %p300 = pneg %p299
      // Predicated region
      $region9: #{tpu_custom_call.1} parent=5 // pred_check
        _
      $region10: #{tpu_custom_call.1} parent=5 // pred_check_branch
        %302 = sbr.rel (%p299) target = $region12
      $region11: #{tpu_custom_call.1} parent=5 // pred_region
        %s303 = ssub.s32 %s33, 1
        // Predicated region
        $region13: #{tpu_custom_call.1} parent=11 // pred_check
          %p304 = pneg %p54
        $region14: #{tpu_custom_call.1} parent=11 // pred_check_branch
          %306 = sbr.rel (%p304) target = $region16
        $region15: #{tpu_custom_call.1} parent=11 // pred_region
          %s308 = ssub.s32 16, 16
          %309 = vsyncadd [#allocation5], %s308
          %312 = dma.hbm_to_smem %s0, 16, [#allocation2], [#allocation5]
        $region16: #{tpu_custom_call.1} parent=11 // pred_fallthru
          _
        // Predicated region
        $region17: #{tpu_custom_call.1} parent=11 // pred_check
          %p313 = pneg %p75
        $region18: #{tpu_custom_call.1} parent=11 // pred_check_branch
          %315 = sbr.rel (%p313) target = $region20
        $region19: #{tpu_custom_call.1} parent=11 // pred_region
          %s317 = ssub.s32 16, 16
          %318 = vsyncadd [#allocation6], %s317
          %s320 = sshll.u32 %s1, 4
          %s321 = int_to_ptr.vmem [resolvable:$true] %s320
          %323 = dma.vmem_to_smem %s321, 16, [#allocation7], [#allocation6]
        $region20: #{tpu_custom_call.1} parent=11 // pred_fallthru
          _
        // Predicated region
        $region21: #{tpu_custom_call.1} parent=11 // pred_check
          %p324 = pneg %p96
        $region22: #{tpu_custom_call.1} parent=11 // pred_check_branch
          %326 = sbr.rel (%p324) target = $region24
        $region23: #{tpu_custom_call.1} parent=11 // pred_region
          %s328 = ssub.s32 16, 16
          %329 = vsyncadd [#allocation9], %s328
          %s331 = sshll.u32 %s2, 4
          %s332 = int_to_ptr.vmem [resolvable:$true] %s331
          %334 = dma.vmem_to_smem %s332, 16, [#allocation8], [#allocation9]
        $region24: #{tpu_custom_call.1} parent=11 // pred_fallthru
          _
        // Predicated region
        $region25: #{tpu_custom_call.1} parent=11 // pred_check
          %p335 = pneg %p195
        $region26: #{tpu_custom_call.1} parent=11 // pred_check_branch
          %337 = sbr.rel (%p335) target = $region28
        $region27: #{tpu_custom_call.1} parent=11 // pred_region
          %s339 = ssub.s32 1024, 1024
          %340 = vsyncadd [#allocation15], %s339
          %s341 = sshll.u32 [#allocation14], 4
          %s342 = int_to_ptr.vmem [resolvable:$true] %s341
          %347 = dma.hbm_to_vmem [thread:$0]  %s6, 1024, %s342, [#allocation15], 64, 64, 4
        $region28: #{tpu_custom_call.1} parent=11 // pred_fallthru
          _
        // Predicated region
        $region29: #{tpu_custom_call.1} parent=11 // pred_check
          %p348 = pneg %p216
        $region30: #{tpu_custom_call.1} parent=11 // pred_check_branch
          %350 = sbr.rel (%p348) target = $region32
        $region31: #{tpu_custom_call.1} parent=11 // pred_region
          %s352 = ssub.s32 512, 512
          %353 = vsyncadd [#allocation15], %s352
          %s354 = sshll.u32 [#allocation16], 4
          %s355 = int_to_ptr.vmem [resolvable:$true] %s354
          %360 = dma.hbm_to_vmem [thread:$0]  %s7, 512, %s355, [#allocation15], 64, 64, 4
        $region32: #{tpu_custom_call.1} parent=11 // pred_fallthru
          _
        // Predicated region
        $region33: #{tpu_custom_call.1} parent=11 // pred_check
          %p361 = pneg %p237
        $region34: #{tpu_custom_call.1} parent=11 // pred_check_branch
          %363 = sbr.rel (%p361) target = $region36
        $region35: #{tpu_custom_call.1} parent=11 // pred_region
          _
        $region36: #{tpu_custom_call.1} parent=11 // pred_fallthru
          _
      $region12: #{tpu_custom_call.1} parent=5 // pred_fallthru
        _
      %p364 = scmp.lt.s32.totalorder %s33, 4
      // Predicated region
      $region37: #{tpu_custom_call.1} parent=5 // pred_check
        %p365 = pneg %p364
      $region38: #{tpu_custom_call.1} parent=5 // pred_check_branch
        %367 = sbr.rel (%p365) target = $region40
      $region39: #{tpu_custom_call.1} parent=5 // pred_region
        // Predicated region
        $region41: #{tpu_custom_call.1} parent=39 // pred_check
          %p368 = pneg %p116
        $region42: #{tpu_custom_call.1} parent=39 // pred_check_branch
          %370 = sbr.rel (%p368) target = $region44
        $region43: #{tpu_custom_call.1} parent=39 // pred_region
          %s371 = sand.u32 %s106, 1
          %s372 = scalar_lea.sflag [#allocation3], %s371
          %s373 = sand.u32 %s106, 1
          %s374 = smul.addr %s373, 32
          %s375 = scalar_lea.vmem [#allocation10], %s374
          %s376 = smul.u32 2, %s33
          %s378 = ssub.s32 512, 512
          %379 = vsyncadd %s372, %s378
          %s380 = smul.addr %s376, 4
          %s381 = smul.addr %s380, 64
          %s382 = scalar_lea.hbm %s3, %s381
          %s383 = sshll.u32 %s375, 4
          %s384 = int_to_ptr.vmem [resolvable:$true] %s383
          %389 = dma.hbm_to_vmem [thread:$0]  %s382, 512, %s384, %s372, 64, 64, 4
        $region44: #{tpu_custom_call.1} parent=39 // pred_fallthru
          _
        // Predicated region
        $region45: #{tpu_custom_call.1} parent=39 // pred_check
          %p390 = pneg %p142
        $region46: #{tpu_custom_call.1} parent=39 // pred_check_branch
          %392 = sbr.rel (%p390) target = $region48
        $region47: #{tpu_custom_call.1} parent=39 // pred_region
          %s393 = sand.u32 %s33, 1
          %s394 = scalar_lea.sflag [#allocation12], %s393
          %s395 = sand.u32 %s132, 1
          %s396 = smul.addr %s395, 32
          %s397 = scalar_lea.vmem [#allocation11], %s396
          %s398 = smul.u32 2, %s33
          %s400 = ssub.s32 512, 512
          %401 = vsyncadd %s394, %s400
          %s402 = smul.addr %s398, 4
          %s403 = smul.addr %s402, 64
          %s404 = scalar_lea.hbm %s4, %s403
          %s405 = sshll.u32 %s397, 4
          %s406 = int_to_ptr.vmem [resolvable:$true] %s405
          %411 = dma.hbm_to_vmem [thread:$0]  %s404, 512, %s406, %s394, 64, 64, 4
        $region48: #{tpu_custom_call.1} parent=39 // pred_fallthru
          _
        // Predicated region
        $region49: #{tpu_custom_call.1} parent=39 // pred_check
          %p412 = pneg %p168
        $region50: #{tpu_custom_call.1} parent=39 // pred_check_branch
          %414 = sbr.rel (%p412) target = $region52
        $region51: #{tpu_custom_call.1} parent=39 // pred_region
          %s415 = sand.u32 %s33, 1
          %s416 = scalar_lea.sflag [#allocation12], %s415
          %s417 = sand.u32 %s158, 1
          %s418 = smul.addr %s417, 32
          %s419 = scalar_lea.vmem [#allocation13], %s418
          %s420 = smul.u32 2, %s33
          %s422 = ssub.s32 512, 512
          %423 = vsyncadd %s416, %s422
          %s424 = smul.addr %s420, 4
          %s425 = smul.addr %s424, 64
          %s426 = scalar_lea.hbm %s5, %s425
          %s427 = sshll.u32 %s419, 4
          %s428 = int_to_ptr.vmem [resolvable:$true] %s427
          %433 = dma.hbm_to_vmem [thread:$0]  %s426, 512, %s428, %s416, 64, 64, 4
        $region52: #{tpu_custom_call.1} parent=39 // pred_fallthru
          _
      $region40: #{tpu_custom_call.1} parent=5 // pred_fallthru
        _
      %p434 = scmp.le.s32.totalorder 1, %s33
      %p435 = scmp.lt.s32.totalorder %s33, 5
      %p436 = pnand %p434, %p435
      %p437 = pneg %p436
      // Predicated region
      $region53: #{tpu_custom_call.1} parent=5 // pred_check
        _
      $region54: #{tpu_custom_call.1} parent=5 // pred_check_branch
        %439 = sbr.rel (%p436) target = $region56
      $region55: #{tpu_custom_call.1} parent=5 // pred_region
        %s440 = ssub.s32 %s33, 1
        // Predicated region
        $region57: #{tpu_custom_call.1} parent=55 // pred_check
          %p441 = pneg %p54
        $region58: #{tpu_custom_call.1} parent=55 // pred_check_branch
          %443 = sbr.rel (%p441) target = $region60
        $region59: #{tpu_custom_call.1} parent=55 // pred_region
          %444 = dma.done [#allocation5], 16
        $region60: #{tpu_custom_call.1} parent=55 // pred_fallthru
          _
        // Predicated region
        $region61: #{tpu_custom_call.1} parent=55 // pred_check
          %p445 = pneg %p75
        $region62: #{tpu_custom_call.1} parent=55 // pred_check_branch
          %447 = sbr.rel (%p445) target = $region64
        $region63: #{tpu_custom_call.1} parent=55 // pred_region
          %448 = dma.done [#allocation6], 16
        $region64: #{tpu_custom_call.1} parent=55 // pred_fallthru
          _
        // Predicated region
        $region65: #{tpu_custom_call.1} parent=55 // pred_check
          %p449 = pneg %p96
        $region66: #{tpu_custom_call.1} parent=55 // pred_check_branch
          %451 = sbr.rel (%p449) target = $region68
        $region67: #{tpu_custom_call.1} parent=55 // pred_region
          %452 = dma.done [#allocation9], 16
        $region68: #{tpu_custom_call.1} parent=55 // pred_fallthru
          _
        %s453 = sand.u32 %s109, 1
        %s454 = scalar_lea.sflag [#allocation3], %s453
        %s455 = sand.u32 %s109, 1
        %s456 = smul.addr %s455, 32
        %s457 = scalar_lea.vmem [#allocation10], %s456
        // Predicated region
        $region69: #{tpu_custom_call.1} parent=55 // pred_check
          %p458 = pneg %p122
        $region70: #{tpu_custom_call.1} parent=55 // pred_check_branch
          %460 = sbr.rel (%p458) target = $region72
        $region71: #{tpu_custom_call.1} parent=55 // pred_region
          %461 = dma.done %s454, 512
        $region72: #{tpu_custom_call.1} parent=55 // pred_fallthru
          _
        %s462 = sand.u32 %s38, 1
        %s463 = scalar_lea.sflag [#allocation12], %s462
        %s464 = sand.u32 %s135, 1
        %s465 = smul.addr %s464, 32
        %s466 = scalar_lea.vmem [#allocation11], %s465
        // Predicated region
        $region73: #{tpu_custom_call.1} parent=55 // pred_check
          %p467 = pneg %p148
        $region74: #{tpu_custom_call.1} parent=55 // pred_check_branch
          %469 = sbr.rel (%p467) target = $region76
        $region75: #{tpu_custom_call.1} parent=55 // pred_region
          %470 = dma.done %s463, 512
        $region76: #{tpu_custom_call.1} parent=55 // pred_fallthru
          _
        %s471 = sand.u32 %s38, 1
        %s472 = scalar_lea.sflag [#allocation12], %s471
        %s473 = sand.u32 %s161, 1
        %s474 = smul.addr %s473, 32
        %s475 = scalar_lea.vmem [#allocation13], %s474
        // Predicated region
        $region77: #{tpu_custom_call.1} parent=55 // pred_check
          %p476 = pneg %p174
        $region78: #{tpu_custom_call.1} parent=55 // pred_check_branch
          %478 = sbr.rel (%p476) target = $region80
        $region79: #{tpu_custom_call.1} parent=55 // pred_region
          %479 = dma.done %s472, 512
        $region80: #{tpu_custom_call.1} parent=55 // pred_fallthru
          _
        // Predicated region
        $region81: #{tpu_custom_call.1} parent=55 // pred_check
          %p480 = pneg %p195
        $region82: #{tpu_custom_call.1} parent=55 // pred_check_branch
          %482 = sbr.rel (%p480) target = $region84
        $region83: #{tpu_custom_call.1} parent=55 // pred_region
          %483 = dma.done [#allocation15], 1024
        $region84: #{tpu_custom_call.1} parent=55 // pred_fallthru
          _
        // Predicated region
        $region85: #{tpu_custom_call.1} parent=55 // pred_check
          %p484 = pneg %p216
        $region86: #{tpu_custom_call.1} parent=55 // pred_check_branch
          %486 = sbr.rel (%p484) target = $region88
        $region87: #{tpu_custom_call.1} parent=55 // pred_region
          %487 = dma.done [#allocation15], 512
        $region88: #{tpu_custom_call.1} parent=55 // pred_fallthru
          _
        %488 = sfence
        %p489 = pneg %p54
        %p490 = pneg %p51
        %p491 = pneg %p75
        %p492 = pneg %p72
        %p493 = pneg %p96
        %p494 = pneg %p93
        %s495 = sand.u32 %s109, 1
        %s496 = scalar_lea.sflag [#allocation3], %s495
        %s497 = sand.u32 %s109, 1
        %s498 = smul.addr %s497, 32
        %s499 = scalar_lea.vmem [#allocation10], %s498
        %p500 = pneg %p122
        %p501 = pneg %p119
        %s502 = sand.u32 %s38, 1
        %s503 = scalar_lea.sflag [#allocation12], %s502
        %s504 = sand.u32 %s135, 1
        %s505 = smul.addr %s504, 32
        %s506 = scalar_lea.vmem [#allocation11], %s505
        %p507 = pneg %p148
        %p508 = pneg %p145
        %s509 = sand.u32 %s38, 1
        %s510 = scalar_lea.sflag [#allocation12], %s509
        %s511 = sand.u32 %s161, 1
        %s512 = smul.addr %s511, 32
        %s513 = scalar_lea.vmem [#allocation13], %s512
        %p514 = pneg %p174
        %p515 = pneg %p171
        %p516 = pneg %p195
        %p517 = pneg %p192
        %p518 = pneg %p216
        %p519 = pneg %p213
        %p520 = pneg %p237
        %p521 = pneg %p234
        %p522 = pneg %p263
        %p523 = pneg %p260
        %s524 = sand.u32 %s250, 1
        %s525 = scalar_lea.sflag [#allocation4], %s524
        %s526 = sand.u32 %s250, 1
        %s527 = smul.addr %s526, 64
        %s528 = scalar_lea.vmem [#allocation17], %s527
        %p529 = pneg %p289
        %p530 = pneg %p286
        %s531 = sand.u32 %s276, 1
        %s532 = scalar_lea.sflag [#allocation19], %s531
        %s533 = sand.u32 %s276, 1
        %s534 = scalar_lea.vmem [#allocation18], %s533
        %s535 = smul.u32 2, %s38
        %s536 = smul.u32 2, %s38
        %s537 = smul.u32 2, %s38
        %s538 = smul.u32 2, %s38
        %s540 = smul.u32 %s38, 2
        %v541 = vld [vmem:[%s457] sm:$0xf]
        %v542 = vld [vmem:[%s457 + $0x4] sm:$0xf]
        %v543 = vld [vmem:[%s457 + $0x8] sm:$0xf]
        %v544 = vld [vmem:[%s457 + $0xc] sm:$0xf]
        %v545 = vld [vmem:[%s457 + $0x10] sm:$0xf]
        %v546 = vld [vmem:[%s457 + $0x14] sm:$0xf]
        %v547 = vld [vmem:[%s457 + $0x18] sm:$0xf]
        %v548 = vld [vmem:[%s457 + $0x1c] sm:$0xf]
        %v549 = vunpack.c.l.bf16 %v541
        %v550 = vunpack.c.l.bf16 %v542
        %v551 = vunpack.c.l.bf16 %v543
        %v552 = vunpack.c.l.bf16 %v544
        %v553 = vunpack.c.l.bf16 %v545
        %v554 = vunpack.c.l.bf16 %v546
        %v555 = vunpack.c.l.bf16 %v547
        %v556 = vunpack.c.l.bf16 %v548
        %v557 = vld [vmem:[%s466] sm:$0xf]
        %v558 = vld [vmem:[%s466 + $0x4] sm:$0xf]
        %v559 = vld [vmem:[%s466 + $0x8] sm:$0xf]
        %v560 = vld [vmem:[%s466 + $0xc] sm:$0xf]
        %v561 = vld [vmem:[%s466 + $0x10] sm:$0xf]
        %v562 = vld [vmem:[%s466 + $0x14] sm:$0xf]
        %v563 = vld [vmem:[%s466 + $0x18] sm:$0xf]
        %v564 = vld [vmem:[%s466 + $0x1c] sm:$0xf]
        %v565 = vunpack.c.l.bf16 %v557
        %v566 = vunpack.c.l.bf16 %v558
        %v567 = vunpack.c.l.bf16 %v559
        %v568 = vunpack.c.l.bf16 %v560
        %v569 = vunpack.c.l.bf16 %v561
        %v570 = vunpack.c.l.bf16 %v562
        %v571 = vunpack.c.l.bf16 %v563
        %v572 = vunpack.c.l.bf16 %v564
        %v573 = vld [vmem:[%s8] sm:$0x1]
        %s574 = sld [smem:[#allocation2 + %s540]]
        %s575 = sld [smem:[#allocation7 + %s540]]
        %v576 = vstv %s574
        %v577 = vmul.f32 %v576, %v549
        %v578 = vmul.f32 %v576, %v550
        %v579 = vmul.f32 %v576, %v551
        %v580 = vmul.f32 %v576, %v552
        %v581 = vstv %s575
        %v582 = vmul.f32 %v581, %v565
        %v583 = vmul.f32 %v581, %v566
        %v584 = vmul.f32 %v581, %v567
        %v585 = vmul.f32 %v581, %v568
        %v586 = vadd.f32 %v577, %v582
        %v587 = vadd.f32 %v578, %v583
        %v588 = vadd.f32 %v579, %v584
        %v589 = vadd.f32 %v580, %v585
        %v590 = vmax.f32 %v586, -1.1
        %v591 = vmax.f32 %v587, -1.1
        %v592 = vmax.f32 %v588, -1.1
        %v593 = vmax.f32 %v589, -1.1
        %v594 = vmin.f32 %v590, 1.1
        %v595 = vmin.f32 %v591, 1.1
        %v596 = vmin.f32 %v592, 1.1
        %v597 = vmin.f32 %v593, 1.1
        %v598 = vpack.c.bf16 %v595, %v594
        %v599 = vpack.c.bf16 %v597, %v596
        %s600 = sadd.s32 %s540, 1
        %s601 = sld [smem:[#allocation2 + %s600]]
        %s602 = sld [smem:[#allocation7 + %s600]]
        %v603 = vstv %s601
        %v604 = vmul.f32 %v603, %v553
        %v605 = vmul.f32 %v603, %v554
        %v606 = vmul.f32 %v603, %v555
        %v607 = vmul.f32 %v603, %v556
        %v608 = vstv %s602
        %v609 = vmul.f32 %v608, %v569
        %v610 = vmul.f32 %v608, %v570
        %v611 = vmul.f32 %v608, %v571
        %v612 = vmul.f32 %v608, %v572
        %v613 = vadd.f32 %v604, %v609
        %v614 = vadd.f32 %v605, %v610
        %v615 = vadd.f32 %v606, %v611
        %v616 = vadd.f32 %v607, %v612
        %v617 = vmax.f32 %v613, -1.1
        %v618 = vmax.f32 %v614, -1.1
        %v619 = vmax.f32 %v615, -1.1
        %v620 = vmax.f32 %v616, -1.1
        %v621 = vmin.f32 %v617, 1.1
        %v622 = vmin.f32 %v618, 1.1
        %v623 = vmin.f32 %v619, 1.1
        %v624 = vmin.f32 %v620, 1.1
        %v625 = vpack.c.bf16 %v622, %v621
        %v626 = vpack.c.bf16 %v624, %v623
        %v627 = vld [vmem:[#allocation14] sm:$0xf]
        %v628 = vld [vmem:[#allocation14 + $0x4] sm:$0xf]
        %v629 = vld [vmem:[#allocation14 + $0x8] sm:$0xf]
        %v630 = vld [vmem:[#allocation14 + $0xc] sm:$0xf]
        %v631 = vld [vmem:[#allocation14 + $0x10] sm:$0xf]
        %v632 = vld [vmem:[#allocation14 + $0x14] sm:$0xf]
        %v633 = vld [vmem:[#allocation14 + $0x18] sm:$0xf]
        %v634 = vld [vmem:[#allocation14 + $0x1c] sm:$0xf]
        %v635 = vld [vmem:[#allocation14 + $0x20] sm:$0xf]
        %v636 = vld [vmem:[#allocation14 + $0x24] sm:$0xf]
        %v637 = vld [vmem:[#allocation14 + $0x28] sm:$0xf]
        %v638 = vld [vmem:[#allocation14 + $0x2c] sm:$0xf]
        %v639 = vld [vmem:[#allocation14 + $0x30] sm:$0xf]
        %v640 = vld [vmem:[#allocation14 + $0x34] sm:$0xf]
        %v641 = vld [vmem:[#allocation14 + $0x38] sm:$0xf]
        %v642 = vld [vmem:[#allocation14 + $0x3c] sm:$0xf]
        %v643 = vld [vmem:[%s475] sm:$0xf]
        %v644 = vld [vmem:[%s475 + $0x4] sm:$0xf]
        %v645 = vld [vmem:[%s475 + $0x8] sm:$0xf]
        %v646 = vld [vmem:[%s475 + $0xc] sm:$0xf]
        %v647 = vld [vmem:[%s475 + $0x10] sm:$0xf]
        %v648 = vld [vmem:[%s475 + $0x14] sm:$0xf]
        %v649 = vld [vmem:[%s475 + $0x18] sm:$0xf]
        %v650 = vld [vmem:[%s475 + $0x1c] sm:$0xf]
        %v651 = vld [vmem:[#allocation16] sm:$0xf]
        %v652 = vld [vmem:[#allocation16 + $0x4] sm:$0xf]
        %v653 = vld [vmem:[#allocation16 + $0x8] sm:$0xf]
        %v654 = vld [vmem:[#allocation16 + $0xc] sm:$0xf]
        %v655 = vld [vmem:[#allocation16 + $0x10] sm:$0xf]
        %v656 = vld [vmem:[#allocation16 + $0x14] sm:$0xf]
        %v657 = vld [vmem:[#allocation16 + $0x18] sm:$0xf]
        %v658 = vld [vmem:[#allocation16 + $0x1c] sm:$0xf]
        %v667 = vunpack.c.l.b16 %v643
        %v668 = vunpack.c.l.b16 %v644
        %v669 = vunpack.c.l.b16 %v645
        %v670 = vunpack.c.l.b16 %v646
        %v671 = vunpack.c.l.b16 %v647
        %v672 = vunpack.c.l.b16 %v648
        %v673 = vunpack.c.l.b16 %v649
        %v674 = vunpack.c.l.b16 %v650
        %v675 = vpack.c.b16 %v668, %v667
        %v676 = vpack.c.b16 %v670, %v669
        %v677 = vpack.c.b16 %v672, %v671
        %v678 = vpack.c.b16 %v674, %v673
        %v687 = vunpack.c.l.b16 %v651
        %v688 = vunpack.c.l.b16 %v652
        %v689 = vunpack.c.l.b16 %v653
        %v690 = vunpack.c.l.b16 %v654
        %v691 = vunpack.c.l.b16 %v655
        %v692 = vunpack.c.l.b16 %v656
        %v693 = vunpack.c.l.b16 %v657
        %v694 = vunpack.c.l.b16 %v658
        %v695 = vpack.c.b16 %v688, %v687
        %v696 = vpack.c.b16 %v690, %v689
        %v697 = vpack.c.b16 %v692, %v691
        %v698 = vpack.c.b16 %v694, %v693
        %vm703 = vcmask 523264
        %v705 = vsel %vm703, %v675, 0
        %v708 = vsel %vm703, %v676, 0
        %v711 = vsel %vm703, %v677, 0
        %v714 = vsel %vm703, %v678, 0
        %716 = vmatprep.subr.bf16.mxu0 0
        %717 = vmatpush1.bf16.msra.mxu0 0
        %718 = vmatprep.subr.bf16.mxu0 0
        %719 = vmatpush1.bf16.msra.mxu0 0
        %720 = vmatprep.subr.bf16.mxu0 0
        %721 = vmatpush1.bf16.msra.mxu0 0
        %722 = vmatprep.subr.bf16.mxu0 0
        %723 = vmatpush1.bf16.msra.mxu0 0
        %724 = vmatprep.subr.bf16.mxu0 0
        %725 = vmatpush1.bf16.msra.mxu0 %v698
        %726 = vmatprep.subr.bf16.mxu0 0
        %727 = vmatpush1.bf16.msra.mxu0 %v697
        %728 = vmatprep.subr.bf16.mxu0 0
        %729 = vmatpush1.bf16.msra.mxu0 %v696
        %730 = vmatprep.subr.bf16.mxu0 0
        %731 = vmatpush1.bf16.msra.mxu0 %v695
        %732 = vmatprep.subr.bf16.mxu0 0
        %733 = vmatpush2.bf16.msra.mxu0 0
        %734 = vmatprep.subr.bf16.mxu0 0
        %735 = vmatpush2.bf16.msra.mxu0 0
        %736 = vmatprep.subr.bf16.mxu0 0
        %737 = vmatpush2.bf16.msra.mxu0 0
        %738 = vmatprep.subr.bf16.mxu0 0
        %739 = vmatpush2.bf16.msra.mxu0 0
        %740 = vmatprep.subr.bf16.mxu0 0
        %741 = vmatpush2.bf16.msra.mxu0 0
        %742 = vmatprep.subr.bf16.mxu0 0
        %743 = vmatpush2.bf16.msra.mxu0 0
        %744 = vmatprep.subr.bf16.mxu0 0
        %745 = vmatpush2.bf16.msra.mxu0 0
        %746 = vmatprep.subr.bf16.mxu0 0
        %747 = vmatpush2.bf16.msra.mxu0 0
        %748 = vmatprep.mubr.bf16.mxu0 0
        %749 = vmatmul.mubr.bf16.gmra.mxu0 %v705
        %v750 = vpop.f32.mrf.mxu0
        %v751 = vadd.f32 0.0, %v750
        %v752 = vpop.f32.mrf.mxu0
        %v753 = vpop.f32.mrf.mxu0
        %v754 = vadd.f32 0.0, %v753
        %v755 = vpop.f32.mrf.mxu0
        %756 = vmatprep.mubr.bf16.mxu0 0
        %757 = vmatmul.mubr.bf16.gmra.mxu0 %v708
        %v758 = vpop.f32.mrf.mxu0
        %v759 = vadd.f32 0.0, %v758
        %v760 = vpop.f32.mrf.mxu0
        %v761 = vpop.f32.mrf.mxu0
        %v762 = vadd.f32 0.0, %v761
        %v763 = vpop.f32.mrf.mxu0
        %764 = vmatprep.mubr.bf16.mxu0 0
        %765 = vmatmul.mubr.bf16.gmra.mxu0 %v711
        %v766 = vpop.f32.mrf.mxu0
        %v767 = vadd.f32 0.0, %v766
        %v768 = vpop.f32.mrf.mxu0
        %v769 = vpop.f32.mrf.mxu0
        %v770 = vadd.f32 0.0, %v769
        %v771 = vpop.f32.mrf.mxu0
        %772 = vmatprep.mubr.bf16.mxu0 0
        %773 = vmatmul.mubr.bf16.gmra.mxu0 %v714
        %v774 = vpop.f32.mrf.mxu0
        %v775 = vadd.f32 0.0, %v774
        %v776 = vpop.f32.mrf.mxu0
        %v777 = vpop.f32.mrf.mxu0
        %v778 = vadd.f32 0.0, %v777
        %v779 = vpop.f32.mrf.mxu0
        %780 = vdwg.mxu0
        %v797 = vunpack.c.l.b16 %v627
        %v798 = vunpack.c.l.b16 %v628
        %v799 = vunpack.c.l.b16 %v629
        %v800 = vunpack.c.l.b16 %v630
        %v801 = vunpack.c.l.b16 %v631
        %v802 = vunpack.c.l.b16 %v632
        %v803 = vunpack.c.l.b16 %v633
        %v804 = vunpack.c.l.b16 %v634
        %v805 = vunpack.c.l.b16 %v635
        %v806 = vunpack.c.l.b16 %v636
        %v807 = vunpack.c.l.b16 %v637
        %v808 = vunpack.c.l.b16 %v638
        %v809 = vunpack.c.l.b16 %v639
        %v810 = vunpack.c.l.b16 %v640
        %v811 = vunpack.c.l.b16 %v641
        %v812 = vunpack.c.l.b16 %v642
        %v813 = vpack.c.b16 %v798, %v797
        %v814 = vpack.c.b16 %v800, %v799
        %v815 = vpack.c.b16 %v802, %v801
        %v816 = vpack.c.b16 %v804, %v803
        %v817 = vpack.c.b16 %v806, %v805
        %v818 = vpack.c.b16 %v808, %v807
        %v819 = vpack.c.b16 %v810, %v809
        %v820 = vpack.c.b16 %v812, %v811
        %829 = vmatprep.subr.bf16.mxu0 0
        %830 = vmatpush1.bf16.msra.mxu0 %v820
        %831 = vmatprep.subr.bf16.mxu0 0
        %832 = vmatpush1.bf16.msra.mxu0 %v819
        %833 = vmatprep.subr.bf16.mxu0 0
        %834 = vmatpush1.bf16.msra.mxu0 %v818
        %835 = vmatprep.subr.bf16.mxu0 0
        %836 = vmatpush1.bf16.msra.mxu0 %v817
        %837 = vmatprep.subr.bf16.mxu0 0
        %838 = vmatpush1.bf16.msra.mxu0 %v816
        %839 = vmatprep.subr.bf16.mxu0 0
        %840 = vmatpush1.bf16.msra.mxu0 %v815
        %841 = vmatprep.subr.bf16.mxu0 0
        %842 = vmatpush1.bf16.msra.mxu0 %v814
        %843 = vmatprep.subr.bf16.mxu0 0
        %844 = vmatpush1.bf16.msra.mxu0 %v813
        %845 = vmatprep.subr.bf16.mxu0 0
        %846 = vmatpush2.bf16.msra.mxu0 0
        %847 = vmatprep.subr.bf16.mxu0 0
        %848 = vmatpush2.bf16.msra.mxu0 0
        %849 = vmatprep.subr.bf16.mxu0 0
        %850 = vmatpush2.bf16.msra.mxu0 0
        %851 = vmatprep.subr.bf16.mxu0 0
        %852 = vmatpush2.bf16.msra.mxu0 0
        %853 = vmatprep.subr.bf16.mxu0 0
        %854 = vmatpush2.bf16.msra.mxu0 0
        %855 = vmatprep.subr.bf16.mxu0 0
        %856 = vmatpush2.bf16.msra.mxu0 0
        %857 = vmatprep.subr.bf16.mxu0 0
        %858 = vmatpush2.bf16.msra.mxu0 0
        %859 = vmatprep.subr.bf16.mxu0 0
        %860 = vmatpush2.bf16.msra.mxu0 0
        %861 = vmatprep.mubr.bf16.mxu0 0
        %862 = vmatmul.mubr.bf16.gmra.mxu0 %v598
        %v863 = vpop.f32.mrf.mxu0
        %v864 = vadd.f32 %v751, %v863
        %v865 = vpop.f32.mrf.mxu0
        %v866 = vpop.f32.mrf.mxu0
        %v867 = vadd.f32 %v754, %v866
        %v868 = vpop.f32.mrf.mxu0
        %869 = vmatprep.mubr.bf16.mxu0 0
        %870 = vmatmul.mubr.bf16.gmra.mxu0 %v599
        %v871 = vpop.f32.mrf.mxu0
        %v872 = vadd.f32 %v759, %v871
        %v873 = vpop.f32.mrf.mxu0
        %v874 = vpop.f32.mrf.mxu0
        %v875 = vadd.f32 %v762, %v874
        %v876 = vpop.f32.mrf.mxu0
        %877 = vmatprep.mubr.bf16.mxu0 0
        %878 = vmatmul.mubr.bf16.gmra.mxu0 %v625
        %v879 = vpop.f32.mrf.mxu0
        %v880 = vadd.f32 %v767, %v879
        %v881 = vpop.f32.mrf.mxu0
        %v882 = vpop.f32.mrf.mxu0
        %v883 = vadd.f32 %v770, %v882
        %v884 = vpop.f32.mrf.mxu0
        %885 = vmatprep.mubr.bf16.mxu0 0
        %886 = vmatmul.mubr.bf16.gmra.mxu0 %v626
        %v887 = vpop.f32.mrf.mxu0
        %v888 = vadd.f32 %v775, %v887
        %v889 = vpop.f32.mrf.mxu0
        %v890 = vpop.f32.mrf.mxu0
        %v891 = vadd.f32 %v778, %v890
        %v892 = vpop.f32.mrf.mxu0
        %893 = vdwg.mxu0
        %s894 = sld [smem:[#allocation8 + %s540]]
        %v895 = vstv %s894
        %v896 = vmul.f32 %v895, %v573
        %v898 = vlaneseq
        %v899 = vshrl.u32 %v898, 7
        %v900 = vsub.s32 0, %v899
        %v901 = vrot.slane %v896, %v900
        %v903 = vadd.f32 %v864, %v901
        %v904 = vadd.f32 %v867, %v901
        %v905 = vadd.f32 %v872, %v901
        %v906 = vadd.f32 %v875, %v901
        %v907 = vtanh.pop %v903
        %v908 = vtanh.pop %v904
        %v909 = vtanh.pop %v905
        %v910 = vtanh.pop %v906
        %911 = vst [vmem:[%s528] sm:$0xff] %v907
        %912 = vst [vmem:[%s528 + $0x8] sm:$0xff] %v908
        %913 = vst [vmem:[%s528 + $0x10] sm:$0xff] %v909
        %914 = vst [vmem:[%s528 + $0x18] sm:$0xff] %v910
        %v915 = vsub.f32 %v907, %v549
        %v916 = vsub.f32 %v908, %v550
        %v917 = vsub.f32 %v909, %v551
        %v918 = vsub.f32 %v910, %v552
        %v919 = vmul.f32 %v915, %v915
        %v920 = vmul.f32 %v916, %v916
        %v921 = vmul.f32 %v917, %v917
        %v922 = vmul.f32 %v918, %v918
        %v923 = vadd.f32 %v919, %v920
        %v924 = vadd.f32 %v923, %v921
        %v925 = vadd.f32 %v924, %v922
        %v926 = vrot.slane %v925, 4
        %v927 = vadd.f32 %v925, %v926
        %v928 = vrot.slane %v927, 2
        %v929 = vadd.f32 %v927, %v928
        %v930 = vrot.slane %v929, 1
        %v931 = vadd.f32 %v929, %v930
        %v932 = vadd.f32 %v931, 0.0
        %s933 = sld [smem:[#allocation8 + %s600]]
        %v934 = vstv %s933
        %v935 = vmul.f32 %v934, %v573
        %v937 = vlaneseq
        %v938 = vshrl.u32 %v937, 7
        %v939 = vsub.s32 0, %v938
        %v940 = vrot.slane %v935, %v939
        %v942 = vadd.f32 %v880, %v940
        %v943 = vadd.f32 %v883, %v940
        %v944 = vadd.f32 %v888, %v940
        %v945 = vadd.f32 %v891, %v940
        %v946 = vtanh.pop %v942
        %v947 = vtanh.pop %v943
        %v948 = vtanh.pop %v944
        %v949 = vtanh.pop %v945
        %s950 = scalar_lea.vmem %s528, 32 [#allocation17]
        %951 = vst [vmem:[%s950] sm:$0xff] %v946
        %952 = vst [vmem:[%s950 + $0x8] sm:$0xff] %v947
        %953 = vst [vmem:[%s950 + $0x10] sm:$0xff] %v948
        %954 = vst [vmem:[%s950 + $0x18] sm:$0xff] %v949
        %v955 = vsub.f32 %v946, %v553
        %v956 = vsub.f32 %v947, %v554
        %v957 = vsub.f32 %v948, %v555
        %v958 = vsub.f32 %v949, %v556
        %v959 = vmul.f32 %v955, %v955
        %v960 = vmul.f32 %v956, %v956
        %v961 = vmul.f32 %v957, %v957
        %v962 = vmul.f32 %v958, %v958
        %v963 = vadd.f32 %v959, %v960
        %v964 = vadd.f32 %v963, %v961
        %v965 = vadd.f32 %v964, %v962
        %v966 = vrot.slane %v965, 4
        %v967 = vadd.f32 %v965, %v966
        %v968 = vrot.slane %v967, 2
        %v969 = vadd.f32 %v967, %v968
        %v970 = vrot.slane %v969, 1
        %v971 = vadd.f32 %v969, %v970
        %v972 = vadd.f32 %v932, %v971
        %973 = vst [vmem:[%s534] sm:$0x1] %v972
        %s974 = sand.u32 %s250, 1
        %s975 = scalar_lea.sflag [#allocation4], %s974
        %s976 = sand.u32 %s250, 1
        %s977 = smul.addr %s976, 64
        %s978 = scalar_lea.vmem [#allocation17], %s977
        %s979 = sand.u32 %s276, 1
        %s980 = scalar_lea.sflag [#allocation19], %s979
        %s981 = sand.u32 %s276, 1
        %s982 = scalar_lea.vmem [#allocation18], %s981
        // Predicated region
        $region89: #{tpu_custom_call.1} parent=55 // pred_check
          %p983 = pneg %p260
        $region90: #{tpu_custom_call.1} parent=55 // pred_check_branch
          %985 = sbr.rel (%p983) target = $region92
        $region91: #{tpu_custom_call.1} parent=55 // pred_region
          %s986 = smul.u32 2, %s38
          %s988 = ssub.s32 1024, 1024
          %989 = vsyncadd %s975, %s988
          %s990 = smul.addr %s986, 4
          %s991 = smul.addr %s990, 128
          %s992 = scalar_lea.hbm %s9, %s991
          %s993 = sshll.u32 %s978, 4
          %s994 = int_to_ptr.vmem [resolvable:$true] %s993
          %999 = dma.vmem_to_hbm [thread:$0]  %s994, 1024, %s992, %s975, 128, 128, 8
        $region92: #{tpu_custom_call.1} parent=55 // pred_fallthru
          _
        // Predicated region
        $region93: #{tpu_custom_call.1} parent=55 // pred_check
          %p1000 = pneg %p286
        $region94: #{tpu_custom_call.1} parent=55 // pred_check_branch
          %1002 = sbr.rel (%p1000) target = $region96
        $region95: #{tpu_custom_call.1} parent=55 // pred_region
          %s1004 = ssub.s32 16, 16
          %1005 = vsyncadd %s980, %s1004
          %s1006 = smul.addr %s38, 16
          %s1007 = scalar_lea.hbm %s10, %s1006
          %s1009 = sshll.u32 %s982, 4
          %s1010 = int_to_ptr.vmem [resolvable:$true] %s1009
          %1012 = dma.vmem_to_hbm [thread:$0]  %s1010, 16, %s1007, %s980
        $region96: #{tpu_custom_call.1} parent=55 // pred_fallthru
          _
      $region56: #{tpu_custom_call.1} parent=5 // pred_fallthru
        _
      %p1013 = scmp.le.s32.totalorder 2, %s33
      // Predicated region
      $region97: #{tpu_custom_call.1} parent=5 // pred_check
        %p1014 = pneg %p1013
      $region98: #{tpu_custom_call.1} parent=5 // pred_check_branch
        %1016 = sbr.rel (%p1014) target = $region100
      $region99: #{tpu_custom_call.1} parent=5 // pred_region
        %s1017 = ssub.s32 %s33, 2
        // Predicated region
        $region101: #{tpu_custom_call.1} parent=99 // pred_check
          %p1018 = pneg %p266
        $region102: #{tpu_custom_call.1} parent=99 // pred_check_branch
          %1020 = sbr.rel (%p1018) target = $region104
        $region103: #{tpu_custom_call.1} parent=99 // pred_region
          %s1021 = sand.u32 %s251, 1
          %s1022 = scalar_lea.sflag [#allocation4], %s1021
          %s1023 = sand.u32 %s251, 1
          %s1024 = smul.addr %s1023, 64
          %s1025 = scalar_lea.vmem [#allocation17], %s1024
          %1026 = dma.done %s1022, 1024
        $region104: #{tpu_custom_call.1} parent=99 // pred_fallthru
          _
        // Predicated region
        $region105: #{tpu_custom_call.1} parent=99 // pred_check
          %p1027 = pneg %p292
        $region106: #{tpu_custom_call.1} parent=99 // pred_check_branch
          %1029 = sbr.rel (%p1027) target = $region108
        $region107: #{tpu_custom_call.1} parent=99 // pred_region
          %s1030 = sand.u32 %s277, 1
          %s1031 = scalar_lea.sflag [#allocation19], %s1030
          %s1032 = sand.u32 %s277, 1
          %s1033 = scalar_lea.vmem [#allocation18], %s1032
          %1034 = dma.done %s1031, 16
        $region108: #{tpu_custom_call.1} parent=99 // pred_fallthru
          _
      $region100: #{tpu_custom_call.1} parent=5 // pred_fallthru
        _
    $region6: #{tpu_custom_call.1} parent=1 // loop_footer
      %s37 = sadd.s32 1, %s33
    $region7: #{tpu_custom_call.1} parent=1 // loop_footer_branch
      %32 = sbr.rel target = $region3
    $region8: #{tpu_custom_call.1} parent=1 // loop_exit
      _
    %1035 = vsyncpa [#allocation3], 1
    %s1036 = scalar_lea.sflag [#allocation3], 1
    %1037 = vsyncpa %s1036, 1
    %1038 = vsyncpa [#allocation12], 1
    %s1039 = scalar_lea.sflag [#allocation12], 1
    %1040 = vsyncpa %s1039, 1
    %1041 = vsyncpa [#allocation15], 1
    %1042 = vsyncpa [#allocation4], 1
    %s1043 = scalar_lea.sflag [#allocation4], 1
    %1044 = vsyncpa %s1043, 1
    %1045 = vsyncpa [#allocation19], 1
    %s1046 = scalar_lea.sflag [#allocation19], 1
    %1047 = vsyncpa %s1046, 1
    %1048 = vsyncpa [#allocation5], 1
    %s1049 = scalar_lea.sflag [#allocation5], 1
    %1050 = vsyncpa %s1049, 1
    %1051 = vsyncpa [#allocation6], 1
    %s1052 = scalar_lea.sflag [#allocation6], 1
    %1053 = vsyncpa %s1052, 1
    %1054 = vsyncpa [#allocation9], 1

</llo_original>
